<compile_context>
chip_gen: v7x
topology: tpu7x:2x2x1
jax: 0.10.0
libtpu: 0.0.40
codegen_flags: <defaults>
</compile_context>

<pallas_src>
import functools

import jax
import jax.numpy as jnp
from jax import lax
from jax.experimental import pallas as pl
from jax.experimental.pallas import tpu as pltpu


def _qkv_proj_kernel(x_ref, wqT_ref, wkT_ref, wvT_ref, bq_ref, bk_ref, bv_ref,
                     q_ref, k_ref, v_ref, *, head_dim: int):
    """Pass 1: Q/K/V input projections for one (batch, seq-tile).

    Runs once per sequence tile, so the projection FLOPs are not recomputed
    per query tile by the attention pass.  bf16 x bf16 -> f32 accumulation on
    the MXU; outputs stored bf16; 1/sqrt(Dh) folded into q once.
    """
    x = x_ref[0].astype(jnp.bfloat16)                                   # (TL, E)
    scale = 1.0 / jnp.sqrt(jnp.float32(head_dim))

    q = jnp.dot(x, wqT_ref[...], preferred_element_type=jnp.float32) + bq_ref[...]
    k = jnp.dot(x, wkT_ref[...], preferred_element_type=jnp.float32) + bk_ref[...]
    v = jnp.dot(x, wvT_ref[...], preferred_element_type=jnp.float32) + bv_ref[...]

    q_ref[0] = (q * scale).astype(jnp.bfloat16)
    k_ref[0] = k.astype(jnp.bfloat16)
    v_ref[0] = v.astype(jnp.bfloat16)


def _attn_kernel(xq_ref, q_ref, k_ref, v_ref, woT_ref, bo_ref, mask_ref,
                 gamma_ref, beta_ref, o_ref, ctx_ref, *, num_heads: int):
    """Pass 2: per-head attention -> single out-proj matmul -> residual -> LN.

    One (batch, query-tile) per grid step; K/V are the full-L bf16 blocks
    produced by pass 1.
    """
    xq_f32 = xq_ref[0].astype(jnp.float32)               # (TQ, E) residual path
    q = q_ref[0]                                          # (TQ, E) bf16, pre-scaled
    k = k_ref[0]                                          # (L,  E) bf16
    v = v_ref[0]                                          # (L,  E) bf16
    mask = mask_ref[...].astype(jnp.float32)              # (TQ, L) additive

    TQ, E = q.shape
    H = num_heads
    Dh = E // H

    # Per-head attention (static loop; H is small and static).  Each head's
    # context is written into the bf16 VMEM scratch at lane offset h*Dh so the
    # output projection below runs as ONE full-contraction (K=E) matmul.
    # NOTE: if Dh is not a multiple of 128 these are masked lane stores;
    # consider packing two heads per 128-lane store for Dh=64 at scale.
    for h in range(H):
        sl = slice(h * Dh, (h + 1) * Dh)
        s = lax.dot_general(
            q[:, sl], k[:, sl],
            dimension_numbers=(((1,), (1,)), ((), ())),
            preferred_element_type=jnp.float32) + mask                  # (TQ, L)
        m = jnp.max(s, axis=-1, keepdims=True)
        p = jnp.exp(s - m)
        p = p * pl.reciprocal(jnp.sum(p, axis=-1, keepdims=True), approx=True)
        ctx_h = jnp.dot(p.astype(jnp.bfloat16), v[:, sl],
                        preferred_element_type=jnp.float32)             # (TQ, Dh)
        ctx_ref[:, sl] = ctx_h.astype(jnp.bfloat16)

    # Single output projection (K=E), then bias + residual.
    y = (jnp.dot(ctx_ref[...], woT_ref[...], preferred_element_type=jnp.float32)
         + bo_ref[...] + xq_f32)

    # LayerNorm over the embedding dim (eps = 1e-5, biased variance), f32.
    mean = jnp.mean(y, axis=-1, keepdims=True)
    var = jnp.mean((y - mean) ** 2, axis=-1, keepdims=True)
    out = (y - mean) * lax.rsqrt(var + 1e-5) * gamma_ref[...] + beta_ref[...]

    o_ref[0] = out.astype(o_ref.dtype)


def _vmem_limit_bytes() -> int:
    """75% of the device's physical VMEM (64 MiB v7x, 128 MiB v5e/v6e)."""
    cap = 64 * 1024 * 1024
    try:
        cap = int(getattr(pltpu.get_tpu_info(), "vmem_capacity_bytes", cap))
    except Exception:
        pass
    return (cap * 3) // 4


def global_self_attention(x, attn_mask, params, *, num_heads: int, tq: int = 256):
    """x: (B, L, E) float32, attn_mask: (L, L) additive float mask."""
    B, L, E = x.shape
    assert E % num_heads == 0, "embedding_size must divide evenly into heads"
    Dh = E // num_heads
    TQ = min(tq, L)
    assert L % TQ == 0, "sequence length must be divisible by the query tile"
    n_q = L // TQ
    # TODO(synk): no ragged-tail handling; L must tile cleanly by TQ.

    # Parameter glue (split/transpose/dtype) kept in plain JAX.
    wq, wk, wv = jnp.split(params["in_proj_weight"], 3, axis=0)   # each (E, E)
    bq, bk, bv = jnp.split(params["in_proj_bias"], 3, axis=0)     # each (E,)
    wqT = wq.T.astype(jnp.bfloat16)
    wkT = wk.T.astype(jnp.bfloat16)
    wvT = wv.T.astype(jnp.bfloat16)
    woT = params["out_proj_weight"].T.astype(jnp.bfloat16)
    bq2 = bq.reshape(1, E).astype(jnp.float32)
    bk2 = bk.reshape(1, E).astype(jnp.float32)
    bv2 = bv.reshape(1, E).astype(jnp.float32)
    bo2 = params["out_proj_bias"].reshape(1, E).astype(jnp.float32)
    gamma2 = params["ln_weight"].reshape(1, E).astype(jnp.float32)
    beta2 = params["ln_bias"].reshape(1, E).astype(jnp.float32)
    # bf16 mask: halves mask HBM/VMEM traffic; fine for 0/-1e9 style masks.
    mask = attn_mask.astype(jnp.bfloat16)

    vmem_limit = _vmem_limit_bytes()
    full2d = lambda shape: pl.BlockSpec(shape, lambda b, t: (0, 0))
    seq_spec = pl.BlockSpec((1, TQ, E), lambda b, t: (b, t, 0))

    # ---- pass 1: Q/K/V projections, computed ONCE per (batch, seq tile) ----
    q_bf, k_bf, v_bf = pl.pallas_call(
        functools.partial(_qkv_proj_kernel, head_dim=Dh),
        out_shape=tuple(jax.ShapeDtypeStruct((B, L, E), jnp.bfloat16)
                        for _ in range(3)),
        grid_spec=pltpu.PrefetchScalarGridSpec(
            num_scalar_prefetch=0,
            grid=(B, n_q),
            in_specs=[
                seq_spec,                                            # x tile (f32)
                full2d((E, E)), full2d((E, E)), full2d((E, E)),      # WqT WkT WvT (bf16)
                full2d((1, E)), full2d((1, E)), full2d((1, E)),      # bq bk bv (f32)
            ],
            out_specs=(seq_spec, seq_spec, seq_spec),                # q k v (bf16)
        ),
        compiler_params=pltpu.CompilerParams(
            dimension_semantics=("parallel", "parallel"),
            vmem_limit_bytes=vmem_limit),
    )(x, wqT, wkT, wvT, bq2, bk2, bv2)

    # ---- pass 2: attention + out-proj + residual + LayerNorm ----
    return pl.pallas_call(
        functools.partial(_attn_kernel, num_heads=num_heads),
        out_shape=jax.ShapeDtypeStruct((B, L, E), x.dtype),
        grid_spec=pltpu.PrefetchScalarGridSpec(
            num_scalar_prefetch=0,
            grid=(B, n_q),
            in_specs=[
                pl.BlockSpec((1, TQ, E), lambda b, qi: (b, qi, 0)),  # x residual tile (f32)
                pl.BlockSpec((1, TQ, E), lambda b, qi: (b, qi, 0)),  # q tile (bf16, scaled)
                pl.BlockSpec((1, L, E), lambda b, qi: (b, 0, 0)),    # k full (bf16)
                pl.BlockSpec((1, L, E), lambda b, qi: (b, 0, 0)),    # v full (bf16)
                full2d((E, E)),                                      # WoT (bf16)
                full2d((1, E)),                                      # bo
                pl.BlockSpec((TQ, L), lambda b, qi: (qi, 0)),        # attn_mask tile (bf16)
                full2d((1, E)),                                      # ln gamma
                full2d((1, E)),                                      # ln beta
            ],
            out_specs=pl.BlockSpec((1, TQ, E), lambda b, qi: (b, qi, 0)),
            scratch_shapes=[pltpu.VMEM((TQ, E), jnp.bfloat16)],      # per-head ctx slab
        ),
        compiler_params=pltpu.CompilerParams(
            dimension_semantics=("parallel", "parallel"),
            vmem_limit_bytes=vmem_limit),
    )(x, q_bf, k_bf, v_bf, woT, bo2, mask, gamma2, beta2)


def _reference(x, attn_mask, params, num_heads):
    """Pure-JAX f32 reference mirroring torch.nn.MultiheadAttention + LayerNorm."""
    B, L, E = x.shape
    Dh = E // num_heads
    wq, wk, wv = jnp.split(params["in_proj_weight"], 3, axis=0)
    bq, bk, bv = jnp.split(params["in_proj_bias"], 3, axis=0)
    q = x @ wq.T + bq
    k = x @ wk.T + bk
    v = x @ wv.T + bv
    q = q.reshape(B, L, num_heads, Dh).transpose(0, 2, 1, 3)
    k = k.reshape(B, L, num_heads, Dh).transpose(0, 2, 1, 3)
    v = v.reshape(B, L, num_heads, Dh).transpose(0, 2, 1, 3)
    s = jnp.einsum("bhld,bhmd->bhlm", q, k) / jnp.sqrt(Dh) + attn_mask[None, None]
    p = jax.nn.softmax(s, axis=-1)
    ctx = jnp.einsum("bhlm,bhmd->bhld", p, v).transpose(0, 2, 1, 3).reshape(B, L, E)
    attn_out = ctx @ params["out_proj_weight"].T + params["out_proj_bias"]
    y = attn_out + x
    mean = y.mean(-1, keepdims=True)
    var = ((y - mean) ** 2).mean(-1, keepdims=True)
    yn = (y - mean) / jnp.sqrt(var + 1e-5)
    return yn * params["ln_weight"] + params["ln_bias"]


if __name__ == "__main__":
    B, L, E, H = 2, 8, 32, 4     # batch, seq, embedding_size, num_heads
    key = jax.random.PRNGKey(0)
    k1, k2, k3, k4, k5, kx = jax.random.split(key, 6)

    params = {
        "in_proj_weight": 0.1 * jax.random.normal(k1, (3 * E, E), jnp.float32),
        "in_proj_bias": 0.1 * jax.random.normal(k2, (3 * E,), jnp.float32),
        "out_proj_weight": 0.1 * jax.random.normal(k3, (E, E), jnp.float32),
        "out_proj_bias": 0.1 * jax.random.normal(k4, (E,), jnp.float32),
        "ln_weight": jnp.ones((E,), jnp.float32),
        "ln_bias": jnp.zeros((E,), jnp.float32),
    }

    x = jax.random.normal(kx, (B, L, E), jnp.float32)
    # Causal additive mask (finite large-negative instead of -inf).
    causal = jnp.tril(jnp.ones((L, L), jnp.bool_))
    attn_mask = jnp.where(causal, 0.0, -1e9).astype(jnp.float32)

    out = global_self_attention(x, attn_mask, params, num_heads=H)
    out = jax.block_until_ready(out)

    ref = _reference(x, attn_mask, params, H)
    assert out.shape == (B, L, E)
    # Tolerance relaxed vs. pure-f32: matmuls run in bf16 with f32 accumulation
    # and the softmax denominator uses the approximate EUP reciprocal.
    assert jnp.allclose(out, ref, atol=3e-2, rtol=3e-2), "mismatch vs reference"
    print("KERNEL_OK")
</pallas_src>

<mosaic_0001>
module attributes {stable_mosaic.version = 11 : i64} {
  func.func @_qkv_proj_kernel(%arg0: i32, %arg1: i32, %arg2: memref<1x8x32xf32, #tpu.memory_space<vmem>>, %arg3: memref<32x32xbf16, #tpu.memory_space<vmem>>, %arg4: memref<32x32xbf16, #tpu.memory_space<vmem>>, %arg5: memref<32x32xbf16, #tpu.memory_space<vmem>>, %arg6: memref<1x32xf32, #tpu.memory_space<vmem>>, %arg7: memref<1x32xf32, #tpu.memory_space<vmem>>, %arg8: memref<1x32xf32, #tpu.memory_space<vmem>>, %arg9: memref<1x8x32xbf16, #tpu.memory_space<vmem>>, %arg10: memref<1x8x32xbf16, #tpu.memory_space<vmem>>, %arg11: memref<1x8x32xbf16, #tpu.memory_space<vmem>>) attributes {dimension_semantics = [#tpu.dimension_semantics<parallel>, #tpu.dimension_semantics<parallel>], iteration_bounds = array<i64: 2, 1>, scalar_prefetch = 0 : i64, scratch_operands = 0 : i64, tpu.core_type = #tpu.core_type<tc>, window_params = [{transform_indices = @transform_0, window_bounds = array<i64: 1, 8, 32>}, {pipeline_mode = #tpu.pipeline_mode<synchronous>, transform_indices = @transform_1, window_bounds = array<i64: 32, 32>}, {pipeline_mode = #tpu.pipeline_mode<synchronous>, transform_indices = @transform_2, window_bounds = array<i64: 32, 32>}, {pipeline_mode = #tpu.pipeline_mode<synchronous>, transform_indices = @transform_3, window_bounds = array<i64: 32, 32>}, {pipeline_mode = #tpu.pipeline_mode<synchronous>, transform_indices = @transform_4, window_bounds = array<i64: 1, 32>}, {pipeline_mode = #tpu.pipeline_mode<synchronous>, transform_indices = @transform_5, window_bounds = array<i64: 1, 32>}, {pipeline_mode = #tpu.pipeline_mode<synchronous>, transform_indices = @transform_6, window_bounds = array<i64: 1, 32>}, {transform_indices = @transform_7, window_bounds = array<i64: 1, 8, 32>}, {transform_indices = @transform_8, window_bounds = array<i64: 1, 8, 32>}, {transform_indices = @transform_9, window_bounds = array<i64: 1, 8, 32>}]} {
    %c0 = arith.constant 0 : index
    %c0_0 = arith.constant 0 : index
    %c0_1 = arith.constant 0 : index
    %0 = vector.load %arg2[%c0, %c0_0, %c0_1] : memref<1x8x32xf32, #tpu.memory_space<vmem>>, vector<1x8x32xf32>
    %1 = vector.shape_cast %0 : vector<1x8x32xf32> to vector<8x32xf32>
    %2 = arith.truncf %1 : vector<8x32xf32> to vector<8x32xbf16>
    %cst = arith.constant 8.000000e+00 : f32
    %3 = math.sqrt %cst : f32
    %cst_2 = arith.constant 1.000000e+00 : f32
    %4 = arith.divf %cst_2, %3 : f32
    %c0_3 = arith.constant 0 : index
    %c0_4 = arith.constant 0 : index
    %5 = vector.load %arg3[%c0_3, %c0_4] : memref<32x32xbf16, #tpu.memory_space<vmem>>, vector<32x32xbf16>
    %cst_5 = arith.constant dense<0.000000e+00> : vector<8x32xf32>
    %6 = tpu.matmul %2, %5, %cst_5 {dimension_numbers = #tpu.dot_dimension_numbers<[1], [0], [0], [1], [0, 0, 1, 1], [], []>} : vector<8x32xbf16>, vector<32x32xbf16>, vector<8x32xf32> -> vector<8x32xf32>
    %c0_6 = arith.constant 0 : index
    %c0_7 = arith.constant 0 : index
    %7 = vector.load %arg6[%c0_6, %c0_7] : memref<1x32xf32, #tpu.memory_space<vmem>>, vector<1x32xf32>
    %8 = vector.broadcast %7 : vector<1x32xf32> to vector<8x32xf32>
    %9 = arith.addf %6, %8 : vector<8x32xf32>
    %c0_8 = arith.constant 0 : index
    %c0_9 = arith.constant 0 : index
    %10 = vector.load %arg4[%c0_8, %c0_9] : memref<32x32xbf16, #tpu.memory_space<vmem>>, vector<32x32xbf16>
    %cst_10 = arith.constant dense<0.000000e+00> : vector<8x32xf32>
    %11 = tpu.matmul %2, %10, %cst_10 {dimension_numbers = #tpu.dot_dimension_numbers<[1], [0], [0], [1], [0, 0, 1, 1], [], []>} : vector<8x32xbf16>, vector<32x32xbf16>, vector<8x32xf32> -> vector<8x32xf32>
    %c0_11 = arith.constant 0 : index
    %c0_12 = arith.constant 0 : index
    %12 = vector.load %arg7[%c0_11, %c0_12] : memref<1x32xf32, #tpu.memory_space<vmem>>, vector<1x32xf32>
    %13 = vector.broadcast %12 : vector<1x32xf32> to vector<8x32xf32>
    %14 = arith.addf %11, %13 : vector<8x32xf32>
    %c0_13 = arith.constant 0 : index
    %c0_14 = arith.constant 0 : index
    %15 = vector.load %arg5[%c0_13, %c0_14] : memref<32x32xbf16, #tpu.memory_space<vmem>>, vector<32x32xbf16>
    %cst_15 = arith.constant dense<0.000000e+00> : vector<8x32xf32>
    %16 = tpu.matmul %2, %15, %cst_15 {dimension_numbers = #tpu.dot_dimension_numbers<[1], [0], [0], [1], [0, 0, 1, 1], [], []>} : vector<8x32xbf16>, vector<32x32xbf16>, vector<8x32xf32> -> vector<8x32xf32>
    %c0_16 = arith.constant 0 : index
    %c0_17 = arith.constant 0 : index
    %17 = vector.load %arg8[%c0_16, %c0_17] : memref<1x32xf32, #tpu.memory_space<vmem>>, vector<1x32xf32>
    %18 = vector.broadcast %17 : vector<1x32xf32> to vector<8x32xf32>
    %19 = arith.addf %16, %18 : vector<8x32xf32>
    %20 = vector.broadcast %4 : f32 to vector<8x32xf32>
    %21 = arith.mulf %9, %20 : vector<8x32xf32>
    %22 = arith.truncf %21 : vector<8x32xf32> to vector<8x32xbf16>
    %c0_18 = arith.constant 0 : index
    %c0_19 = arith.constant 0 : index
    %c0_20 = arith.constant 0 : index
    %23 = vector.load %arg9[%c0_18, %c0_19, %c0_20] : memref<1x8x32xbf16, #tpu.memory_space<vmem>>, vector<1x8x32xbf16>
    %24 = vector.shape_cast %23 : vector<1x8x32xbf16> to vector<8x32xbf16>
    %25 = vector.shape_cast %22 : vector<8x32xbf16> to vector<1x8x32xbf16>
    tpu.vector_store %arg9[%c0_18, %c0_19, %c0_20], %25 {strides = array<i32>} : memref<1x8x32xbf16, #tpu.memory_space<vmem>>, vector<1x8x32xbf16>,
    %26 = arith.truncf %14 : vector<8x32xf32> to vector<8x32xbf16>
    %c0_21 = arith.constant 0 : index
    %c0_22 = arith.constant 0 : index
    %c0_23 = arith.constant 0 : index
    %27 = vector.load %arg10[%c0_21, %c0_22, %c0_23] : memref<1x8x32xbf16, #tpu.memory_space<vmem>>, vector<1x8x32xbf16>
    %28 = vector.shape_cast %27 : vector<1x8x32xbf16> to vector<8x32xbf16>
    %29 = vector.shape_cast %26 : vector<8x32xbf16> to vector<1x8x32xbf16>
    tpu.vector_store %arg10[%c0_21, %c0_22, %c0_23], %29 {strides = array<i32>} : memref<1x8x32xbf16, #tpu.memory_space<vmem>>, vector<1x8x32xbf16>,
    %30 = arith.truncf %19 : vector<8x32xf32> to vector<8x32xbf16>
    %c0_24 = arith.constant 0 : index
    %c0_25 = arith.constant 0 : index
    %c0_26 = arith.constant 0 : index
    %31 = vector.load %arg11[%c0_24, %c0_25, %c0_26] : memref<1x8x32xbf16, #tpu.memory_space<vmem>>, vector<1x8x32xbf16>
    %32 = vector.shape_cast %31 : vector<1x8x32xbf16> to vector<8x32xbf16>
    %33 = vector.shape_cast %30 : vector<8x32xbf16> to vector<1x8x32xbf16>
    tpu.vector_store %arg11[%c0_24, %c0_25, %c0_26], %33 {strides = array<i32>} : memref<1x8x32xbf16, #tpu.memory_space<vmem>>, vector<1x8x32xbf16>,
    return
  }
  func.func @transform_0(%arg0: i32, %arg1: i32) -> (i32, i32, i32) {
    %c0_i32 = arith.constant 0 : i32
    %c0_i32_0 = arith.constant 0 : i32
    return %arg0, %arg1, %c0_i32 : i32, i32, i32
  }
  func.func @transform_1(%arg0: i32, %arg1: i32) -> (i32, i32) {
    %c0_i32 = arith.constant 0 : i32
    %c0_i32_0 = arith.constant 0 : i32
    %c0_i32_1 = arith.constant 0 : i32
    return %c0_i32, %c0_i32_0 : i32, i32
  }
  func.func @transform_2(%arg0: i32, %arg1: i32) -> (i32, i32) {
    %c0_i32 = arith.constant 0 : i32
    %c0_i32_0 = arith.constant 0 : i32
    %c0_i32_1 = arith.constant 0 : i32
    return %c0_i32, %c0_i32_0 : i32, i32
  }
  func.func @transform_3(%arg0: i32, %arg1: i32) -> (i32, i32) {
    %c0_i32 = arith.constant 0 : i32
    %c0_i32_0 = arith.constant 0 : i32
    %c0_i32_1 = arith.constant 0 : i32
    return %c0_i32, %c0_i32_0 : i32, i32
  }
  func.func @transform_4(%arg0: i32, %arg1: i32) -> (i32, i32) {
    %c0_i32 = arith.constant 0 : i32
    %c0_i32_0 = arith.constant 0 : i32
    %c0_i32_1 = arith.constant 0 : i32
    return %c0_i32, %c0_i32_0 : i32, i32
  }
  func.func @transform_5(%arg0: i32, %arg1: i32) -> (i32, i32) {
    %c0_i32 = arith.constant 0 : i32
    %c0_i32_0 = arith.constant 0 : i32
    %c0_i32_1 = arith.constant 0 : i32
    return %c0_i32, %c0_i32_0 : i32, i32
  }
  func.func @transform_6(%arg0: i32, %arg1: i32) -> (i32, i32) {
    %c0_i32 = arith.constant 0 : i32
    %c0_i32_0 = arith.constant 0 : i32
    %c0_i32_1 = arith.constant 0 : i32
    return %c0_i32, %c0_i32_0 : i32, i32
  }
  func.func @transform_7(%arg0: i32, %arg1: i32) -> (i32, i32, i32) {
    %c0_i32 = arith.constant 0 : i32
    %c0_i32_0 = arith.constant 0 : i32
    return %arg0, %arg1, %c0_i32 : i32, i32, i32
  }
  func.func @transform_8(%arg0: i32, %arg1: i32) -> (i32, i32, i32) {
    %c0_i32 = arith.constant 0 : i32
    %c0_i32_0 = arith.constant 0 : i32
    return %arg0, %arg1, %c0_i32 : i32, i32, i32
  }
  func.func @transform_9(%arg0: i32, %arg1: i32) -> (i32, i32, i32) {
    %c0_i32 = arith.constant 0 : i32
    %c0_i32_0 = arith.constant 0 : i32
    return %arg0, %arg1, %c0_i32 : i32, i32, i32
  }
}

</mosaic_0001>

<llo_original>
// kernel: tpu_custom_call.1
$region0: #{tpu_custom_call.1}
  #allocation0 [shape = 'u32[]', space=smem, size = 0x4, offset = 0x4, fixed_abs, tag = 'smem constant byte address 0x4 - core index']
  #allocation1 [shape = 'u32[144,128]{1,0:T(1,128)}', space=vmem, size = 0x12000, scoped, tag = 'internal scratch']
  %s0 = inlined_call_operand.hbm [shape: f32[2,8,32], index: 0, kind: input, shape index: {}]
  %s1 = inlined_call_operand.hbm [shape: bf16[32,32], index: 1, kind: input, shape index: {}]
  %s2 = inlined_call_operand.hbm [shape: bf16[32,32], index: 2, kind: input, shape index: {}]
  %s3 = inlined_call_operand.hbm [shape: bf16[32,32], index: 3, kind: input, shape index: {}]
  %s4 = inlined_call_operand.vmem [shape: f32[1,32], index: 4, kind: input, shape index: {}]
  %s5 = inlined_call_operand.vmem [shape: f32[1,32], index: 5, kind: input, shape index: {}]
  %s6 = inlined_call_operand.vmem [shape: f32[1,32], index: 6, kind: input, shape index: {}]
  %s7 = inlined_call_operand.hbm [shape: bf16[2,8,32], index: 7, kind: output, shape index: {0}]
  %s8 = inlined_call_operand.hbm [shape: bf16[2,8,32], index: 8, kind: output, shape index: {1}]
  %s9 = inlined_call_operand.hbm [shape: bf16[2,8,32], index: 9, kind: output, shape index: {2}]
  %10 = xla_tuple %s7, %s8, %s9
  %s11 = sld [smem:[#allocation0]]
  $region93: #{tpu_custom_call.1} parent=0
    _
  %s13 = ssub.s32 1, %s11
  %s14 = scalar_select 0, %s13, %s11
  $region1: #{tpu_custom_call.1} parent=0
    #allocation2 [shape = 'u8[8192]{0}', space=vmem, size = 0x2000, scoped, tag = 'input window, operand 0']
    #allocation3 [shape = 's32[2]{0}', space=sflag, size = 0x8, scoped, tag = 'scoped memory for tpu_custom_call.1']
    #allocation4 [shape = 's32[2]{0}', space=sflag, size = 0x8, scoped, tag = 'scoped memory for tpu_custom_call.1']
    #allocation5 [shape = 'u8[8192]{0}', space=vmem, size = 0x2000, scoped, tag = 'input window, operand 1, single buffered']
    #allocation6 [shape = 's32[1]{0}', space=sflag, size = 0x4, scoped, tag = 'scoped memory for tpu_custom_call.1']
    #allocation7 [shape = 'u8[8192]{0}', space=vmem, size = 0x2000, scoped, tag = 'input window, operand 2, single buffered']
    #allocation8 [shape = 'u8[8192]{0}', space=vmem, size = 0x2000, scoped, tag = 'input window, operand 3, single buffered']
    #allocation9 [shape = 's32[1]{0}', space=sflag, size = 0x4, scoped, tag = 'scoped memory for tpu_custom_call.1']
    #allocation10 [shape = 'u8[4096]{0}', space=vmem, size = 0x1000, scoped, tag = 'output window, operand 0']
    #allocation11 [shape = 'u8[4096]{0}', space=vmem, size = 0x1000, scoped, tag = 'output window, operand 1']
    #allocation12 [shape = 's32[2]{0}', space=sflag, size = 0x8, scoped, tag = 'scoped memory for tpu_custom_call.1']
    #allocation13 [shape = 'u8[4096]{0}', space=vmem, size = 0x1000, scoped, tag = 'output window, operand 2']
    %15 = vsyncpa [#allocation3], 0
    %s16 = scalar_lea.sflag [#allocation3], 1
    %17 = vsyncpa %s16, 0
    %18 = vsyncpa [#allocation6], 0
    %19 = vsyncpa [#allocation9], 0
    %20 = vsyncpa [#allocation4], 0
    %s21 = scalar_lea.sflag [#allocation4], 1
    %22 = vsyncpa %s21, 0
    %23 = vsyncpa [#allocation12], 0
    %s24 = scalar_lea.sflag [#allocation12], 1
    %25 = vsyncpa %s24, 0
    loop: start=0, step=1, limit=4
    $region2: #{tpu_custom_call.1} parent=1 // loop_pre_header
      _
    $region3: #{tpu_custom_call.1} parent=1 // loop_header
      %s27 = sphi 0, %s31
      %p28 = scmp.ge.s32.totalorder %s27, 4
      %s34 = sphi 0, %s46
      %s35 = sphi 0, %s42
      %s36 = sphi 0, %s34
      %s37 = sphi 0, %s35
      %s38 = sphi 0, %s36
      %s39 = sphi 0, %s37
      %s51 = sphi 0, %s53
      %s54 = sphi 0, %s51
      %s55 = sphi 0, %s54
      %s71 = sphi 0, %s55
      %s75 = sphi 0, %s75
      %s77 = sphi 0, %s75
      %s78 = sphi 0, %s77
      %s92 = sphi 0, %s78
      %s96 = sphi 0, %s96
      %s98 = sphi 0, %s96
      %s99 = sphi 0, %s98
      %s113 = sphi 0, %s99
      %s117 = sphi 0, %s117
      %s119 = sphi 0, %s117
      %s120 = sphi 0, %s119
      %s134 = sphi 0, %s120
      %s138 = sphi 0, %s138
      %s140 = sphi 0, %s138
      %s141 = sphi 0, %s140
      %s155 = sphi 0, %s141
      %s159 = sphi 0, %s159
      %s161 = sphi 0, %s159
      %s162 = sphi 0, %s161
      %s176 = sphi 0, %s162
      %s180 = sphi 0, %s180
      %s182 = sphi 0, %s180
      %s183 = sphi 0, %s182
      %s197 = sphi 0, %s183
      %s205 = sphi 0, %s207
      %s208 = sphi 0, %s205
      %s209 = sphi 0, %s208
      %s225 = sphi 0, %s209
      %s233 = sphi 0, %s235
      %s236 = sphi 0, %s233
      %s237 = sphi 0, %s236
      %s253 = sphi 0, %s237
      %s261 = sphi 0, %s263
      %s264 = sphi 0, %s261
      %s265 = sphi 0, %s264
      %s281 = sphi 0, %s265
    $region4: #{tpu_custom_call.1} parent=1 // loop_header_branch
      %30 = sbr.rel (%p28) target = $region8
    $region5: #{tpu_custom_call.1} parent=1 // loop_body
      %s32 = ssub.s32 %s27, 1
      %s33 = ssub.s32 %s27, 2
      %s40 = sadd.s32 1, %s35
      %p41 = scmp.ge.s32.totalorder %s40, 1
      %s42 = scalar_select %p41, 0, %s40
      %s43 = sadd.s32 1, %s34
      %s44 = scalar_select %p41, %s43, %s34
      %p45 = scmp.ge.s32.totalorder %s44, 2
      %s46 = scalar_select %p45, 0, %s44
      %s47 = ssub.s32 %s34, %s46
      %s48 = ssub.s32 %s35, %s42
      %s49 = sor.u32 %s47, %s48
      %p50 = scmp.eq.s32.totalorder %s49, 0
      %s52 = sadd.s32 %s51, 1
      %s53 = scalar_select %p50, %s51, %s52
      %p56 = pneg %p50
      %p57 = scmp.eq.s32.totalorder %s27, 1
      %p58 = por %p56, %p57
      %p59 = scmp.ne.s32.totalorder %s51, %s54
      %p60 = scmp.eq.s32.totalorder %s27, 0
      %p61 = por %p59, %p60
      %p62 = scmp.ne.s32.totalorder %s51, %s54
      %p63 = scmp.eq.s32.totalorder %s32, 1
      %p64 = por %p62, %p63
      %p65 = scmp.ne.s32.totalorder %s54, %s55
      %p66 = scmp.eq.s32.totalorder %s32, 0
      %p67 = por %p65, %p66
      %p68 = scmp.ne.s32.totalorder %s54, %s55
      %p69 = scmp.eq.s32.totalorder %s33, 1
      %p70 = por %p68, %p69
      %p72 = scmp.ne.s32.totalorder %s55, %s71
      %p73 = scmp.eq.s32.totalorder %s33, 0
      %p74 = por %p72, %p73
      %s76 = sadd.s32 %s75, 1
      %p79 = scmp.eq.s32.totalorder %s27, 1
      %p80 = scmp.ne.s32.totalorder %s75, %s77
      %p81 = scmp.eq.s32.totalorder %s27, 0
      %p82 = por %p80, %p81
      %p83 = scmp.ne.s32.totalorder %s75, %s77
      %p84 = scmp.eq.s32.totalorder %s32, 1
      %p85 = por %p83, %p84
      %p86 = scmp.ne.s32.totalorder %s77, %s78
      %p87 = scmp.eq.s32.totalorder %s32, 0
      %p88 = por %p86, %p87
      %p89 = scmp.ne.s32.totalorder %s77, %s78
      %p90 = scmp.eq.s32.totalorder %s33, 1
      %p91 = por %p89, %p90
      %p93 = scmp.ne.s32.totalorder %s78, %s92
      %p94 = scmp.eq.s32.totalorder %s33, 0
      %p95 = por %p93, %p94
      %s97 = sadd.s32 %s96, 1
      %p100 = scmp.eq.s32.totalorder %s27, 1
      %p101 = scmp.ne.s32.totalorder %s96, %s98
      %p102 = scmp.eq.s32.totalorder %s27, 0
      %p103 = por %p101, %p102
      %p104 = scmp.ne.s32.totalorder %s96, %s98
      %p105 = scmp.eq.s32.totalorder %s32, 1
      %p106 = por %p104, %p105
      %p107 = scmp.ne.s32.totalorder %s98, %s99
      %p108 = scmp.eq.s32.totalorder %s32, 0
      %p109 = por %p107, %p108
      %p110 = scmp.ne.s32.totalorder %s98, %s99
      %p111 = scmp.eq.s32.totalorder %s33, 1
      %p112 = por %p110, %p111
      %p114 = scmp.ne.s32.totalorder %s99, %s113
      %p115 = scmp.eq.s32.totalorder %s33, 0
      %p116 = por %p114, %p115
      %s118 = sadd.s32 %s117, 1
      %p121 = scmp.eq.s32.totalorder %s27, 1
      %p122 = scmp.ne.s32.totalorder %s117, %s119
      %p123 = scmp.eq.s32.totalorder %s27, 0
      %p124 = por %p122, %p123
      %p125 = scmp.ne.s32.totalorder %s117, %s119
      %p126 = scmp.eq.s32.totalorder %s32, 1
      %p127 = por %p125, %p126
      %p128 = scmp.ne.s32.totalorder %s119, %s120
      %p129 = scmp.eq.s32.totalorder %s32, 0
      %p130 = por %p128, %p129
      %p131 = scmp.ne.s32.totalorder %s119, %s120
      %p132 = scmp.eq.s32.totalorder %s33, 1
      %p133 = por %p131, %p132
      %p135 = scmp.ne.s32.totalorder %s120, %s134
      %p136 = scmp.eq.s32.totalorder %s33, 0
      %p137 = por %p135, %p136
      %s139 = sadd.s32 %s138, 1
      %p142 = scmp.eq.s32.totalorder %s27, 1
      %p143 = scmp.ne.s32.totalorder %s138, %s140
      %p144 = scmp.eq.s32.totalorder %s27, 0
      %p145 = por %p143, %p144
      %p146 = scmp.ne.s32.totalorder %s138, %s140
      %p147 = scmp.eq.s32.totalorder %s32, 1
      %p148 = por %p146, %p147
      %p149 = scmp.ne.s32.totalorder %s140, %s141
      %p150 = scmp.eq.s32.totalorder %s32, 0
      %p151 = por %p149, %p150
      %p152 = scmp.ne.s32.totalorder %s140, %s141
      %p153 = scmp.eq.s32.totalorder %s33, 1
      %p154 = por %p152, %p153
      %p156 = scmp.ne.s32.totalorder %s141, %s155
      %p157 = scmp.eq.s32.totalorder %s33, 0
      %p158 = por %p156, %p157
      %s160 = sadd.s32 %s159, 1
      %p163 = scmp.eq.s32.totalorder %s27, 1
      %p164 = scmp.ne.s32.totalorder %s159, %s161
      %p165 = scmp.eq.s32.totalorder %s27, 0
      %p166 = por %p164, %p165
      %p167 = scmp.ne.s32.totalorder %s159, %s161
      %p168 = scmp.eq.s32.totalorder %s32, 1
      %p169 = por %p167, %p168
      %p170 = scmp.ne.s32.totalorder %s161, %s162
      %p171 = scmp.eq.s32.totalorder %s32, 0
      %p172 = por %p170, %p171
      %p173 = scmp.ne.s32.totalorder %s161, %s162
      %p174 = scmp.eq.s32.totalorder %s33, 1
      %p175 = por %p173, %p174
      %p177 = scmp.ne.s32.totalorder %s162, %s176
      %p178 = scmp.eq.s32.totalorder %s33, 0
      %p179 = por %p177, %p178
      %s181 = sadd.s32 %s180, 1
      %p184 = scmp.eq.s32.totalorder %s27, 1
      %p185 = scmp.ne.s32.totalorder %s180, %s182
      %p186 = scmp.eq.s32.totalorder %s27, 0
      %p187 = por %p185, %p186
      %p188 = scmp.ne.s32.totalorder %s180, %s182
      %p189 = scmp.eq.s32.totalorder %s32, 1
      %p190 = por %p188, %p189
      %p191 = scmp.ne.s32.totalorder %s182, %s183
      %p192 = scmp.eq.s32.totalorder %s32, 0
      %p193 = por %p191, %p192
      %p194 = scmp.ne.s32.totalorder %s182, %s183
      %p195 = scmp.eq.s32.totalorder %s33, 1
      %p196 = por %p194, %p195
      %p198 = scmp.ne.s32.totalorder %s183, %s197
      %p199 = scmp.eq.s32.totalorder %s33, 0
      %p200 = por %p198, %p199
      %s201 = ssub.s32 %s34, %s46
      %s202 = ssub.s32 %s35, %s42
      %s203 = sor.u32 %s201, %s202
      %p204 = scmp.eq.s32.totalorder %s203, 0
      %s206 = sadd.s32 %s205, 1
      %s207 = scalar_select %p204, %s205, %s206
      %p210 = pneg %p204
      %p211 = scmp.eq.s32.totalorder %s27, 1
      %p212 = por %p210, %p211
      %p213 = scmp.ne.s32.totalorder %s205, %s208
      %p214 = scmp.eq.s32.totalorder %s27, 0
      %p215 = por %p213, %p214
      %p216 = scmp.ne.s32.totalorder %s205, %s208
      %p217 = scmp.eq.s32.totalorder %s32, 1
      %p218 = por %p216, %p217
      %p219 = scmp.ne.s32.totalorder %s208, %s209
      %p220 = scmp.eq.s32.totalorder %s32, 0
      %p221 = por %p219, %p220
      %p222 = scmp.ne.s32.totalorder %s208, %s209
      %p223 = scmp.eq.s32.totalorder %s33, 1
      %p224 = por %p222, %p223
      %p226 = scmp.ne.s32.totalorder %s209, %s225
      %p227 = scmp.eq.s32.totalorder %s33, 0
      %p228 = por %p226, %p227
      %s229 = ssub.s32 %s34, %s46
      %s230 = ssub.s32 %s35, %s42
      %s231 = sor.u32 %s229, %s230
      %p232 = scmp.eq.s32.totalorder %s231, 0
      %s234 = sadd.s32 %s233, 1
      %s235 = scalar_select %p232, %s233, %s234
      %p238 = pneg %p232
      %p239 = scmp.eq.s32.totalorder %s27, 1
      %p240 = por %p238, %p239
      %p241 = scmp.ne.s32.totalorder %s233, %s236
      %p242 = scmp.eq.s32.totalorder %s27, 0
      %p243 = por %p241, %p242
      %p244 = scmp.ne.s32.totalorder %s233, %s236
      %p245 = scmp.eq.s32.totalorder %s32, 1
      %p246 = por %p244, %p245
      %p247 = scmp.ne.s32.totalorder %s236, %s237
      %p248 = scmp.eq.s32.totalorder %s32, 0
      %p249 = por %p247, %p248
      %p250 = scmp.ne.s32.totalorder %s236, %s237
      %p251 = scmp.eq.s32.totalorder %s33, 1
      %p252 = por %p250, %p251
      %p254 = scmp.ne.s32.totalorder %s237, %s253
      %p255 = scmp.eq.s32.totalorder %s33, 0
      %p256 = por %p254, %p255
      %s257 = ssub.s32 %s34, %s46
      %s258 = ssub.s32 %s35, %s42
      %s259 = sor.u32 %s257, %s258
      %p260 = scmp.eq.s32.totalorder %s259, 0
      %s262 = sadd.s32 %s261, 1
      %s263 = scalar_select %p260, %s261, %s262
      %p266 = pneg %p260
      %p267 = scmp.eq.s32.totalorder %s27, 1
      %p268 = por %p266, %p267
      %p269 = scmp.ne.s32.totalorder %s261, %s264
      %p270 = scmp.eq.s32.totalorder %s27, 0
      %p271 = por %p269, %p270
      %p272 = scmp.ne.s32.totalorder %s261, %s264
      %p273 = scmp.eq.s32.totalorder %s32, 1
      %p274 = por %p272, %p273
      %p275 = scmp.ne.s32.totalorder %s264, %s265
      %p276 = scmp.eq.s32.totalorder %s32, 0
      %p277 = por %p275, %p276
      %p278 = scmp.ne.s32.totalorder %s264, %s265
      %p279 = scmp.eq.s32.totalorder %s33, 1
      %p280 = por %p278, %p279
      %p282 = scmp.ne.s32.totalorder %s265, %s281
      %p283 = scmp.eq.s32.totalorder %s33, 0
      %p284 = por %p282, %p283
      %p285 = scmp.le.s32.totalorder 1, %s27
      %p286 = scmp.lt.s32.totalorder %s27, 3
      %p287 = pnand %p285, %p286
      %p288 = pneg %p287
      // Predicated region
      $region9: #{tpu_custom_call.1} parent=5 // pred_check
        _
      $region10: #{tpu_custom_call.1} parent=5 // pred_check_branch
        %290 = sbr.rel (%p287) target = $region12
      $region11: #{tpu_custom_call.1} parent=5 // pred_region
        %s291 = ssub.s32 %s27, 1
        // Predicated region
        $region13: #{tpu_custom_call.1} parent=11 // pred_check
          %p292 = pneg %p88
        $region14: #{tpu_custom_call.1} parent=11 // pred_check_branch
          %294 = sbr.rel (%p292) target = $region16
        $region15: #{tpu_custom_call.1} parent=11 // pred_region
          %s296 = ssub.s32 256, 256
          %297 = vsyncadd [#allocation6], %s296
          %s298 = sshll.u32 [#allocation5], 4
          %s299 = int_to_ptr.vmem [resolvable:$true] %s298
          %304 = dma.hbm_to_vmem [thread:$0]  %s1, 256, %s299, [#allocation6], 64, 64, 4
        $region16: #{tpu_custom_call.1} parent=11 // pred_fallthru
          _
        // Predicated region
        $region17: #{tpu_custom_call.1} parent=11 // pred_check
          %p305 = pneg %p109
        $region18: #{tpu_custom_call.1} parent=11 // pred_check_branch
          %307 = sbr.rel (%p305) target = $region20
        $region19: #{tpu_custom_call.1} parent=11 // pred_region
          %s309 = ssub.s32 256, 256
          %310 = vsyncadd [#allocation6], %s309
          %s311 = sshll.u32 [#allocation7], 4
          %s312 = int_to_ptr.vmem [resolvable:$true] %s311
          %317 = dma.hbm_to_vmem [thread:$0]  %s2, 256, %s312, [#allocation6], 64, 64, 4
        $region20: #{tpu_custom_call.1} parent=11 // pred_fallthru
          _
        // Predicated region
        $region21: #{tpu_custom_call.1} parent=11 // pred_check
          %p318 = pneg %p130
        $region22: #{tpu_custom_call.1} parent=11 // pred_check_branch
          %320 = sbr.rel (%p318) target = $region24
        $region23: #{tpu_custom_call.1} parent=11 // pred_region
          %s322 = ssub.s32 256, 256
          %323 = vsyncadd [#allocation9], %s322
          %s324 = sshll.u32 [#allocation8], 4
          %s325 = int_to_ptr.vmem [resolvable:$true] %s324
          %330 = dma.hbm_to_vmem [thread:$0]  %s3, 256, %s325, [#allocation9], 64, 64, 4
        $region24: #{tpu_custom_call.1} parent=11 // pred_fallthru
          _
        // Predicated region
        $region25: #{tpu_custom_call.1} parent=11 // pred_check
          %p331 = pneg %p151
        $region26: #{tpu_custom_call.1} parent=11 // pred_check_branch
          %333 = sbr.rel (%p331) target = $region28
        $region27: #{tpu_custom_call.1} parent=11 // pred_region
          _
        $region28: #{tpu_custom_call.1} parent=11 // pred_fallthru
          _
        // Predicated region
        $region29: #{tpu_custom_call.1} parent=11 // pred_check
          %p334 = pneg %p172
        $region30: #{tpu_custom_call.1} parent=11 // pred_check_branch
          %336 = sbr.rel (%p334) target = $region32
        $region31: #{tpu_custom_call.1} parent=11 // pred_region
          _
        $region32: #{tpu_custom_call.1} parent=11 // pred_fallthru
          _
        // Predicated region
        $region33: #{tpu_custom_call.1} parent=11 // pred_check
          %p337 = pneg %p193
        $region34: #{tpu_custom_call.1} parent=11 // pred_check_branch
          %339 = sbr.rel (%p337) target = $region36
        $region35: #{tpu_custom_call.1} parent=11 // pred_region
          _
        $region36: #{tpu_custom_call.1} parent=11 // pred_fallthru
          _
      $region12: #{tpu_custom_call.1} parent=5 // pred_fallthru
        _
      %p340 = scmp.lt.s32.totalorder %s27, 2
      // Predicated region
      $region37: #{tpu_custom_call.1} parent=5 // pred_check
        %p341 = pneg %p340
      $region38: #{tpu_custom_call.1} parent=5 // pred_check_branch
        %343 = sbr.rel (%p341) target = $region40
      $region39: #{tpu_custom_call.1} parent=5 // pred_region
        // Predicated region
        $region41: #{tpu_custom_call.1} parent=39 // pred_check
          %p344 = pneg %p61
        $region42: #{tpu_custom_call.1} parent=39 // pred_check_branch
          %346 = sbr.rel (%p344) target = $region44
        $region43: #{tpu_custom_call.1} parent=39 // pred_region
          %s347 = sand.u32 %s51, 1
          %s348 = scalar_lea.sflag [#allocation3], %s347
          %s349 = sand.u32 %s51, 1
          %s350 = smul.addr %s349, 8
          %s351 = scalar_lea.vmem [#allocation2], %s350
          %s353 = ssub.s32 128, 128
          %354 = vsyncadd %s348, %s353
          %s355 = sadd.s32 %s35, %s34
          %s356 = smul.addr %s355, 128
          %s357 = scalar_lea.hbm %s0, %s356
          %s359 = sshll.u32 %s351, 4
          %s360 = int_to_ptr.vmem [resolvable:$true] %s359
          %362 = dma.hbm_to_vmem [thread:$0]  %s357, 128, %s360, %s348
        $region44: #{tpu_custom_call.1} parent=39 // pred_fallthru
          _
      $region40: #{tpu_custom_call.1} parent=5 // pred_fallthru
        _
      %p363 = scmp.le.s32.totalorder 1, %s27
      %p364 = scmp.lt.s32.totalorder %s27, 3
      %p365 = pnand %p363, %p364
      %p366 = pneg %p365
      // Predicated region
      $region45: #{tpu_custom_call.1} parent=5 // pred_check
        _
      $region46: #{tpu_custom_call.1} parent=5 // pred_check_branch
        %368 = sbr.rel (%p365) target = $region48
      $region47: #{tpu_custom_call.1} parent=5 // pred_region
        %s369 = ssub.s32 %s27, 1
        %s370 = sand.u32 %s54, 1
        %s371 = scalar_lea.sflag [#allocation3], %s370
        %s372 = sand.u32 %s54, 1
        %s373 = smul.addr %s372, 8
        %s374 = scalar_lea.vmem [#allocation2], %s373
        // Predicated region
        $region49: #{tpu_custom_call.1} parent=47 // pred_check
          %p375 = pneg %p67
        $region50: #{tpu_custom_call.1} parent=47 // pred_check_branch
          %377 = sbr.rel (%p375) target = $region52
        $region51: #{tpu_custom_call.1} parent=47 // pred_region
          %378 = dma.done %s371, 128
        $region52: #{tpu_custom_call.1} parent=47 // pred_fallthru
          _
        // Predicated region
        $region53: #{tpu_custom_call.1} parent=47 // pred_check
          %p379 = pneg %p88
        $region54: #{tpu_custom_call.1} parent=47 // pred_check_branch
          %381 = sbr.rel (%p379) target = $region56
        $region55: #{tpu_custom_call.1} parent=47 // pred_region
          %382 = dma.done [#allocation6], 256
        $region56: #{tpu_custom_call.1} parent=47 // pred_fallthru
          _
        // Predicated region
        $region57: #{tpu_custom_call.1} parent=47 // pred_check
          %p383 = pneg %p109
        $region58: #{tpu_custom_call.1} parent=47 // pred_check_branch
          %385 = sbr.rel (%p383) target = $region60
        $region59: #{tpu_custom_call.1} parent=47 // pred_region
          %386 = dma.done [#allocation6], 256
        $region60: #{tpu_custom_call.1} parent=47 // pred_fallthru
          _
        // Predicated region
        $region61: #{tpu_custom_call.1} parent=47 // pred_check
          %p387 = pneg %p130
        $region62: #{tpu_custom_call.1} parent=47 // pred_check_branch
          %389 = sbr.rel (%p387) target = $region64
        $region63: #{tpu_custom_call.1} parent=47 // pred_region
          %390 = dma.done [#allocation9], 256
        $region64: #{tpu_custom_call.1} parent=47 // pred_fallthru
          _
        %s391 = sand.u32 %s54, 1
        %s392 = scalar_lea.sflag [#allocation3], %s391
        %s393 = sand.u32 %s54, 1
        %s394 = smul.addr %s393, 8
        %s395 = scalar_lea.vmem [#allocation2], %s394
        %p396 = pneg %p67
        %p397 = pneg %p64
        %p398 = pneg %p88
        %p399 = pneg %p85
        %p400 = pneg %p109
        %p401 = pneg %p106
        %p402 = pneg %p130
        %p403 = pneg %p127
        %p404 = pneg %p151
        %p405 = pneg %p148
        %p406 = pneg %p172
        %p407 = pneg %p169
        %p408 = pneg %p193
        %p409 = pneg %p190
        %p410 = pneg %p221
        %p411 = pneg %p218
        %s412 = sand.u32 %s208, 1
        %s413 = scalar_lea.sflag [#allocation4], %s412
        %s414 = sand.u32 %s208, 1
        %s415 = smul.addr %s414, 4
        %s416 = scalar_lea.vmem [#allocation10], %s415
        %p417 = pneg %p249
        %p418 = pneg %p246
        %s419 = sand.u32 %s32, 1
        %s420 = scalar_lea.sflag [#allocation12], %s419
        %s421 = sand.u32 %s236, 1
        %s422 = smul.addr %s421, 4
        %s423 = scalar_lea.vmem [#allocation11], %s422
        %p424 = pneg %p277
        %p425 = pneg %p274
        %s426 = sand.u32 %s32, 1
        %s427 = scalar_lea.sflag [#allocation12], %s426
        %s428 = sand.u32 %s264, 1
        %s429 = smul.addr %s428, 4
        %s430 = scalar_lea.vmem [#allocation13], %s429
        %v432 = vld [vmem:[%s374] sm:$0xff]
        %v433 = vpack.c.bf16 %v432, %v432
        %v434 = vld [vmem:[#allocation5] sm:$0xf]
        %v435 = vld [vmem:[#allocation5 + $0x4] sm:$0xf]
        %v436 = vld [vmem:[#allocation5 + $0x8] sm:$0xf]
        %v437 = vld [vmem:[#allocation5 + $0xc] sm:$0xf]
        %v438 = vld [vmem:[%s4] sm:$0x1]
        %v440 = vlaneseq
        %v441 = vshrl.u32 %v440, 7
        %v442 = vsub.s32 0, %v441
        %v443 = vrot.slane %v438, %v442
        %v449 = vunpack.c.l.b16 %v434
        %v450 = vunpack.c.l.b16 %v435
        %v451 = vunpack.c.l.b16 %v436
        %v452 = vunpack.c.l.b16 %v437
        %v453 = vpack.c.b16 %v450, %v449
        %v454 = vpack.c.b16 %v452, %v451
        %vm457 = vcmask 261120
        %v459 = vsel %vm457, %v433, 0
        %461 = vmatprep.subr.bf16.mxu0 0
        %462 = vmatpush1.bf16.msra.mxu0 %v453
        %463 = vmatprep.subr.bf16.mxu0 0
        %464 = vmatpush1.bf16.msra.mxu0 %v454
        %465 = vmatprep.subr.bf16.mxu0 0
        %466 = vmatpush1.bf16.msra.mxu0 0
        %467 = vmatprep.subr.bf16.mxu0 0
        %468 = vmatpush1.bf16.msra.mxu0 0
        %469 = vmatprep.subr.bf16.mxu0 0
        %470 = vmatpush1.bf16.msra.mxu0 0
        %471 = vmatprep.subr.bf16.mxu0 0
        %472 = vmatpush1.bf16.msra.mxu0 0
        %473 = vmatprep.subr.bf16.mxu0 0
        %474 = vmatpush1.bf16.msra.mxu0 0
        %475 = vmatprep.subr.bf16.mxu0 0
        %476 = vmatpush1.bf16.msra.mxu0 0
        %477 = vmatprep.subr.bf16.mxu0 0
        %478 = vmatpush1.bf16.msra.mxu0 0
        %479 = vmatprep.subr.bf16.mxu0 0
        %480 = vmatpush1.bf16.msra.mxu0 0
        %481 = vmatprep.subr.bf16.mxu0 0
        %482 = vmatpush1.bf16.msra.mxu0 0
        %483 = vmatprep.subr.bf16.mxu0 0
        %484 = vmatpush1.bf16.msra.mxu0 0
        %485 = vmatprep.subr.bf16.mxu0 0
        %486 = vmatpush1.bf16.msra.mxu0 0
        %487 = vmatprep.subr.bf16.mxu0 0
        %488 = vmatpush1.bf16.msra.mxu0 0
        %489 = vmatprep.subr.bf16.mxu0 0
        %490 = vmatpush1.bf16.msra.mxu0 0
        %491 = vmatprep.subr.bf16.mxu0 0
        %492 = vmatpush1.bf16.msra.mxu0 0
        %493 = vmatprep.mubr.bf16.mxu0 0
        %494 = vmatmul.mubr.bf16.gmra.mrb[0].mxu0 %v459
        %v495 = vpop.f32.mrb[0].mxu0
        %v496 = vadd.f32 %v443, %v495
        %v497 = vpop.f32.mrb[0].mxu0
        %v498 = vpop.f32.mrb[0].mxu0
        %v499 = vpop.f32.mrb[0].mxu0
        %500 = vdwg.mxu0
        %v501 = vld [vmem:[#allocation7] sm:$0xf]
        %v502 = vld [vmem:[#allocation7 + $0x4] sm:$0xf]
        %v503 = vld [vmem:[#allocation7 + $0x8] sm:$0xf]
        %v504 = vld [vmem:[#allocation7 + $0xc] sm:$0xf]
        %v505 = vld [vmem:[%s5] sm:$0x1]
        %v507 = vlaneseq
        %v508 = vshrl.u32 %v507, 7
        %v509 = vsub.s32 0, %v508
        %v510 = vrot.slane %v505, %v509
        %v516 = vunpack.c.l.b16 %v501
        %v517 = vunpack.c.l.b16 %v502
        %v518 = vunpack.c.l.b16 %v503
        %v519 = vunpack.c.l.b16 %v504
        %v520 = vpack.c.b16 %v517, %v516
        %v521 = vpack.c.b16 %v519, %v518
        %524 = vmatprep.subr.bf16.mxu0 0
        %525 = vmatpush1.bf16.msra.mxu0 %v520
        %526 = vmatprep.subr.bf16.mxu0 0
        %527 = vmatpush1.bf16.msra.mxu0 %v521
        %528 = vmatprep.subr.bf16.mxu0 0
        %529 = vmatpush1.bf16.msra.mxu0 0
        %530 = vmatprep.subr.bf16.mxu0 0
        %531 = vmatpush1.bf16.msra.mxu0 0
        %532 = vmatprep.subr.bf16.mxu0 0
        %533 = vmatpush1.bf16.msra.mxu0 0
        %534 = vmatprep.subr.bf16.mxu0 0
        %535 = vmatpush1.bf16.msra.mxu0 0
        %536 = vmatprep.subr.bf16.mxu0 0
        %537 = vmatpush1.bf16.msra.mxu0 0
        %538 = vmatprep.subr.bf16.mxu0 0
        %539 = vmatpush1.bf16.msra.mxu0 0
        %540 = vmatprep.subr.bf16.mxu0 0
        %541 = vmatpush1.bf16.msra.mxu0 0
        %542 = vmatprep.subr.bf16.mxu0 0
        %543 = vmatpush1.bf16.msra.mxu0 0
        %544 = vmatprep.subr.bf16.mxu0 0
        %545 = vmatpush1.bf16.msra.mxu0 0
        %546 = vmatprep.subr.bf16.mxu0 0
        %547 = vmatpush1.bf16.msra.mxu0 0
        %548 = vmatprep.subr.bf16.mxu0 0
        %549 = vmatpush1.bf16.msra.mxu0 0
        %550 = vmatprep.subr.bf16.mxu0 0
        %551 = vmatpush1.bf16.msra.mxu0 0
        %552 = vmatprep.subr.bf16.mxu0 0
        %553 = vmatpush1.bf16.msra.mxu0 0
        %554 = vmatprep.subr.bf16.mxu0 0
        %555 = vmatpush1.bf16.msra.mxu0 0
        %556 = vmatprep.mubr.bf16.mxu0 0
        %557 = vmatmul.mubr.bf16.gmra.mrb[0].mxu0 %v459
        %v558 = vpop.f32.mrb[0].mxu0
        %v559 = vadd.f32 %v510, %v558
        %v560 = vpop.f32.mrb[0].mxu0
        %v561 = vpop.f32.mrb[0].mxu0
        %v562 = vpop.f32.mrb[0].mxu0
        %563 = vdwg.mxu0
        %v564 = vld [vmem:[#allocation8] sm:$0xf]
        %v565 = vld [vmem:[#allocation8 + $0x4] sm:$0xf]
        %v566 = vld [vmem:[#allocation8 + $0x8] sm:$0xf]
        %v567 = vld [vmem:[#allocation8 + $0xc] sm:$0xf]
        %v568 = vld [vmem:[%s6] sm:$0x1]
        %v570 = vlaneseq
        %v571 = vshrl.u32 %v570, 7
        %v572 = vsub.s32 0, %v571
        %v573 = vrot.slane %v568, %v572
        %v579 = vunpack.c.l.b16 %v564
        %v580 = vunpack.c.l.b16 %v565
        %v581 = vunpack.c.l.b16 %v566
        %v582 = vunpack.c.l.b16 %v567
        %v583 = vpack.c.b16 %v580, %v579
        %v584 = vpack.c.b16 %v582, %v581
        %587 = vmatprep.subr.bf16.mxu0 0
        %588 = vmatpush1.bf16.msra.mxu0 %v583
        %589 = vmatprep.subr.bf16.mxu0 0
        %590 = vmatpush1.bf16.msra.mxu0 %v584
        %591 = vmatprep.subr.bf16.mxu0 0
        %592 = vmatpush1.bf16.msra.mxu0 0
        %593 = vmatprep.subr.bf16.mxu0 0
        %594 = vmatpush1.bf16.msra.mxu0 0
        %595 = vmatprep.subr.bf16.mxu0 0
        %596 = vmatpush1.bf16.msra.mxu0 0
        %597 = vmatprep.subr.bf16.mxu0 0
        %598 = vmatpush1.bf16.msra.mxu0 0
        %599 = vmatprep.subr.bf16.mxu0 0
        %600 = vmatpush1.bf16.msra.mxu0 0
        %601 = vmatprep.subr.bf16.mxu0 0
        %602 = vmatpush1.bf16.msra.mxu0 0
        %603 = vmatprep.subr.bf16.mxu0 0
        %604 = vmatpush1.bf16.msra.mxu0 0
        %605 = vmatprep.subr.bf16.mxu0 0
        %606 = vmatpush1.bf16.msra.mxu0 0
        %607 = vmatprep.subr.bf16.mxu0 0
        %608 = vmatpush1.bf16.msra.mxu0 0
        %609 = vmatprep.subr.bf16.mxu0 0
        %610 = vmatpush1.bf16.msra.mxu0 0
        %611 = vmatprep.subr.bf16.mxu0 0
        %612 = vmatpush1.bf16.msra.mxu0 0
        %613 = vmatprep.subr.bf16.mxu0 0
        %614 = vmatpush1.bf16.msra.mxu0 0
        %615 = vmatprep.subr.bf16.mxu0 0
        %616 = vmatpush1.bf16.msra.mxu0 0
        %617 = vmatprep.subr.bf16.mxu0 0
        %618 = vmatpush1.bf16.msra.mxu0 0
        %619 = vmatprep.mubr.bf16.mxu0 0
        %620 = vmatmul.mubr.bf16.gmra.mrb[0].mxu0 %v459
        %v621 = vpop.f32.mrb[0].mxu0
        %v622 = vadd.f32 %v573, %v621
        %v623 = vpop.f32.mrb[0].mxu0
        %v624 = vpop.f32.mrb[0].mxu0
        %v625 = vpop.f32.mrb[0].mxu0
        %626 = vdwg.mxu0
        %v627 = vmul.f32 %v496, 0.35355338
        %v628 = vpack.c.bf16 %v627, %v627
        %vm629 = vcmask 257024
        %630 = vst.msk [vmem:[%s416] sm:$0xf] %vm629, %v628
        %v631 = vpack.c.bf16 %v559, %v559
        %632 = vst.msk [vmem:[%s423] sm:$0xf] %vm629, %v631
        %v633 = vpack.c.bf16 %v622, %v622
        %634 = vst.msk [vmem:[%s430] sm:$0xf] %vm629, %v633
        %s635 = sand.u32 %s208, 1
        %s636 = scalar_lea.sflag [#allocation4], %s635
        %s637 = sand.u32 %s208, 1
        %s638 = smul.addr %s637, 4
        %s639 = scalar_lea.vmem [#allocation10], %s638
        %s640 = sand.u32 %s32, 1
        %s641 = scalar_lea.sflag [#allocation12], %s640
        %s642 = sand.u32 %s236, 1
        %s643 = smul.addr %s642, 4
        %s644 = scalar_lea.vmem [#allocation11], %s643
        %s645 = sand.u32 %s32, 1
        %s646 = scalar_lea.sflag [#allocation12], %s645
        %s647 = sand.u32 %s264, 1
        %s648 = smul.addr %s647, 4
        %s649 = scalar_lea.vmem [#allocation13], %s648
        // Predicated region
        $region65: #{tpu_custom_call.1} parent=47 // pred_check
          %p650 = pneg %p218
        $region66: #{tpu_custom_call.1} parent=47 // pred_check_branch
          %652 = sbr.rel (%p650) target = $region68
        $region67: #{tpu_custom_call.1} parent=47 // pred_region
          %s654 = ssub.s32 64, 64
          %655 = vsyncadd %s636, %s654
          %s656 = sadd.s32 %s37, %s36
          %s657 = smul.addr %s656, 64
          %s658 = scalar_lea.hbm %s7, %s657
          %s660 = sshll.u32 %s639, 4
          %s661 = int_to_ptr.vmem [resolvable:$true] %s660
          %663 = dma.vmem_to_hbm [thread:$0]  %s661, 64, %s658, %s636
        $region68: #{tpu_custom_call.1} parent=47 // pred_fallthru
          _
        // Predicated region
        $region69: #{tpu_custom_call.1} parent=47 // pred_check
          %p664 = pneg %p246
        $region70: #{tpu_custom_call.1} parent=47 // pred_check_branch
          %666 = sbr.rel (%p664) target = $region72
        $region71: #{tpu_custom_call.1} parent=47 // pred_region
          %s668 = ssub.s32 64, 64
          %669 = vsyncadd %s641, %s668
          %s670 = sadd.s32 %s37, %s36
          %s671 = smul.addr %s670, 64
          %s672 = scalar_lea.hbm %s8, %s671
          %s674 = sshll.u32 %s644, 4
          %s675 = int_to_ptr.vmem [resolvable:$true] %s674
          %677 = dma.vmem_to_hbm [thread:$0]  %s675, 64, %s672, %s641
        $region72: #{tpu_custom_call.1} parent=47 // pred_fallthru
          _
        // Predicated region
        $region73: #{tpu_custom_call.1} parent=47 // pred_check
          %p678 = pneg %p274
        $region74: #{tpu_custom_call.1} parent=47 // pred_check_branch
          %680 = sbr.rel (%p678) target = $region76
        $region75: #{tpu_custom_call.1} parent=47 // pred_region
          %s682 = ssub.s32 64, 64
          %683 = vsyncadd %s646, %s682
          %s684 = sadd.s32 %s37, %s36
          %s685 = smul.addr %s684, 64
          %s686 = scalar_lea.hbm %s9, %s685
          %s688 = sshll.u32 %s649, 4
          %s689 = int_to_ptr.vmem [resolvable:$true] %s688
          %691 = dma.vmem_to_hbm [thread:$0]  %s689, 64, %s686, %s646
        $region76: #{tpu_custom_call.1} parent=47 // pred_fallthru
          _
      $region48: #{tpu_custom_call.1} parent=5 // pred_fallthru
        _
      %p692 = scmp.le.s32.totalorder 2, %s27
      // Predicated region
      $region77: #{tpu_custom_call.1} parent=5 // pred_check
        %p693 = pneg %p692
      $region78: #{tpu_custom_call.1} parent=5 // pred_check_branch
        %695 = sbr.rel (%p693) target = $region80
      $region79: #{tpu_custom_call.1} parent=5 // pred_region
        %s696 = ssub.s32 %s27, 2
        // Predicated region
        $region81: #{tpu_custom_call.1} parent=79 // pred_check
          %p697 = pneg %p224
        $region82: #{tpu_custom_call.1} parent=79 // pred_check_branch
          %699 = sbr.rel (%p697) target = $region84
        $region83: #{tpu_custom_call.1} parent=79 // pred_region
          %s700 = sand.u32 %s209, 1
          %s701 = scalar_lea.sflag [#allocation4], %s700
          %s702 = sand.u32 %s209, 1
          %s703 = smul.addr %s702, 4
          %s704 = scalar_lea.vmem [#allocation10], %s703
          %705 = dma.done %s701, 64
        $region84: #{tpu_custom_call.1} parent=79 // pred_fallthru
          _
        // Predicated region
        $region85: #{tpu_custom_call.1} parent=79 // pred_check
          %p706 = pneg %p252
        $region86: #{tpu_custom_call.1} parent=79 // pred_check_branch
          %708 = sbr.rel (%p706) target = $region88
        $region87: #{tpu_custom_call.1} parent=79 // pred_region
          %s709 = sand.u32 %s33, 1
          %s710 = scalar_lea.sflag [#allocation12], %s709
          %s711 = sand.u32 %s237, 1
          %s712 = smul.addr %s711, 4
          %s713 = scalar_lea.vmem [#allocation11], %s712
          %714 = dma.done %s710, 64
        $region88: #{tpu_custom_call.1} parent=79 // pred_fallthru
          _
        // Predicated region
        $region89: #{tpu_custom_call.1} parent=79 // pred_check
          %p715 = pneg %p280
        $region90: #{tpu_custom_call.1} parent=79 // pred_check_branch
          %717 = sbr.rel (%p715) target = $region92
        $region91: #{tpu_custom_call.1} parent=79 // pred_region
          %s718 = sand.u32 %s33, 1
          %s719 = scalar_lea.sflag [#allocation12], %s718
          %s720 = sand.u32 %s265, 1
          %s721 = smul.addr %s720, 4
          %s722 = scalar_lea.vmem [#allocation13], %s721
          %723 = dma.done %s719, 64
        $region92: #{tpu_custom_call.1} parent=79 // pred_fallthru
          _
      $region80: #{tpu_custom_call.1} parent=5 // pred_fallthru
        _
    $region6: #{tpu_custom_call.1} parent=1 // loop_footer
      %s31 = sadd.s32 1, %s27
    $region7: #{tpu_custom_call.1} parent=1 // loop_footer_branch
      %26 = sbr.rel target = $region3
    $region8: #{tpu_custom_call.1} parent=1 // loop_exit
      _
    %724 = vsyncpa [#allocation3], 1
    %s725 = scalar_lea.sflag [#allocation3], 1
    %726 = vsyncpa %s725, 1
    %727 = vsyncpa [#allocation6], 1
    %728 = vsyncpa [#allocation9], 1
    %729 = vsyncpa [#allocation4], 1
    %s730 = scalar_lea.sflag [#allocation4], 1
    %731 = vsyncpa %s730, 1
    %732 = vsyncpa [#allocation12], 1
    %s733 = scalar_lea.sflag [#allocation12], 1
    %734 = vsyncpa %s733, 1

</llo_original>
